<compile_context>
chip_gen: v5e
topology: v5e:2x2
jax: 0.10.0
libtpu: 0.0.40
codegen_flags: <defaults>
</compile_context>

<pallas_src>
import functools

import jax
import jax.numpy as jnp
from jax.experimental import pallas as pl
from jax.experimental.pallas import tpu as pltpu

LANE = 128          # vreg lane width / MXU tile width
SUBLANE_BF16 = 16   # bf16 sublane packing: one bf16 vreg holds 16x128


def _round_up(n, m):
    return ((n + m - 1) // m) * m


def _vmem_budget_bytes():
    """~85% of the physical per-TensorCore VMEM (leaves headroom for compiler
    temporaries / semaphores).  Falls back to a conservative 48 MiB."""
    try:
        cap = int(pltpu.get_tpu_info().vmem_capacity_bytes)
        return int(cap * 0.85)
    except Exception:
        return 48 * 1024 * 1024


def mlp_kernel(x_ref, w1_ref, w2_ref, w3_ref, b_ref, o_ref, *, h_p, n_p):
    """Fused Linear->ReLU->Linear->ReLU->Linear on one batch tile.

    bf16 operands on the MXU with f32 accumulation; bias-add / ReLU on the VPU
    in f32.  b_ref packs the three bias rows: row 0 = b1, row 1 = b2, row 2 = b3.
    """
    b1 = b_ref[0:1, :h_p]
    b2 = b_ref[1:2, :h_p]
    b3 = b_ref[2:3, :n_p]

    # l1 -> relu
    h1 = jnp.dot(x_ref[...], w1_ref[...], preferred_element_type=jnp.float32)
    h1 = jnp.maximum(h1 + b1, 0.0)
    # l2 -> relu
    h2 = jnp.dot(h1.astype(jnp.bfloat16), w2_ref[...],
                 preferred_element_type=jnp.float32)
    h2 = jnp.maximum(h2 + b2, 0.0)
    # l3 (no activation)
    out = jnp.dot(h2.astype(jnp.bfloat16), w3_ref[...],
                  preferred_element_type=jnp.float32)
    o_ref[...] = (out + b3).astype(o_ref.dtype)


def prepare_params(w1, b1, w2, b2, w3, b3):
    """Pad to 128-lane multiples and cast weights to bf16 ONCE (hoisted out of
    the per-call forward path so the kernel is the only HBM consumer of weights)."""
    K, H = w1.shape
    N = w3.shape[1]
    K_p, H_p, N_p = (_round_up(d, LANE) for d in (K, H, N))
    BMAX = max(H_p, N_p)

    def pad_w(w, rows, cols):
        return jnp.pad(w.astype(jnp.bfloat16),
                       ((0, rows - w.shape[0]), (0, cols - w.shape[1])))

    w1_p = pad_w(w1, K_p, H_p)
    w2_p = pad_w(w2, H_p, H_p)
    w3_p = pad_w(w3, H_p, N_p)

    # Fuse the three bias rows into a single (8, BMAX) f32 block.
    bias = jnp.zeros((8, BMAX), jnp.float32)
    bias = bias.at[0, :H].set(b1.reshape(-1).astype(jnp.float32))
    bias = bias.at[1, :H].set(b2.reshape(-1).astype(jnp.float32))
    bias = bias.at[2, :N].set(b3.reshape(-1).astype(jnp.float32))

    dims = dict(K=K, H=H, N=N, K_p=K_p, H_p=H_p, N_p=N_p, BMAX=BMAX)
    return dict(w1=w1_p, w2=w2_p, w3=w3_p, bias=bias, dims=dims)


def neural_net_forward(x, prepared, *, block_m=512):
    """Pallas TPU forward pass of NeuralNet.

    x: (B, input_size) float32; prepared = prepare_params(...).
    Returns (B, num_classes) float32.
    """
    d = prepared["dims"]
    K, H, N = d["K"], d["H"], d["N"]
    K_p, H_p, N_p, BMAX = d["K_p"], d["H_p"], d["N_p"], d["BMAX"]
    B = x.shape[0]
    assert x.shape[1] == K, (x.shape, K)

    # Batch tile: multiple of 16 rows (bf16 sublane packing).
    bm = max(SUBLANE_BF16, min(block_m, _round_up(B, SUBLANE_BF16)))
    # Megacore (v7x): when the batch is big enough, force >= 2 batch tiles so
    # the "parallel" grid axis gives both TensorCores work.
    if B > 256 and _round_up(B, bm) // bm < 2:
        bm = _round_up(pl.cdiv(B, 2), SUBLANE_BF16)

    vmem_budget = _vmem_budget_bytes()

    def vmem_estimate(bm_):
        weights = 2 * (K_p * H_p + H_p * H_p + H_p * N_p)    # bf16, single-buffered
        bias = 4 * 8 * BMAX                                  # f32, single-buffered
        io = 2 * bm_ * K_p * 2 + 2 * bm_ * N_p * 4           # double-buffered x / out
        scratch = bm_ * H_p * (4 + 2) * 2 + bm_ * N_p * 4    # h1/h2 f32 + bf16 casts + out
        return weights + bias + io + scratch

    while bm > SUBLANE_BF16 and vmem_estimate(bm) > vmem_budget:
        bm = max(SUBLANE_BF16, _round_up(bm // 2, SUBLANE_BF16))
    # TODO(synk): if weights alone exceed vmem_budget (H_p/K_p ~ 2048+ on v7x),
    # switch to a K-streaming grid axis instead of weight-stationary specs.

    B_p = _round_up(B, bm)
    x_p = jnp.pad(x.astype(jnp.bfloat16), ((0, B_p - B), (0, K_p - K)))

    # Grid-invariant operands: single pipeline buffer (no useless double-buffer).
    resident = lambda shape: pl.BlockSpec(
        shape, lambda i: (0, 0), pipeline_mode=pl.Buffered(1))

    out_p = pl.pallas_call(
        functools.partial(mlp_kernel, h_p=H_p, n_p=N_p),
        out_shape=jax.ShapeDtypeStruct((B_p, N_p), jnp.float32),
        grid=(B_p // bm,),
        in_specs=[
            pl.BlockSpec((bm, K_p), lambda i: (i, 0)),   # x: batch-tiled, double-buffered
            resident((K_p, H_p)),                        # w1
            resident((H_p, H_p)),                        # w2
            resident((H_p, N_p)),                        # w3
            resident((8, BMAX)),                         # fused biases
        ],
        out_specs=pl.BlockSpec((bm, N_p), lambda i: (i, 0)),   # lane-dense output
        compiler_params=pltpu.CompilerParams(
            dimension_semantics=("parallel",),   # v7x: 2 TCs split batch tiles
            vmem_limit_bytes=vmem_budget,
        ),
    )(x_p, prepared["w1"], prepared["w2"], prepared["w3"], prepared["bias"])

    return out_p[:B, :N]


def init_params(key, input_size, hidden_size, num_classes):
    """Deterministic PyTorch-style uniform init (U(-1/sqrt(fan_in), +))."""
    ks = jax.random.split(key, 6)

    def linear(kw, kb, fan_in, fan_out):
        bound = 1.0 / jnp.sqrt(jnp.float32(fan_in))
        # stored directly as (in, out) == W.T relative to torch's (out, in)
        w = jax.random.uniform(kw, (fan_in, fan_out), jnp.float32, -bound, bound)
        b = jax.random.uniform(kb, (1, fan_out), jnp.float32, -bound, bound)
        return w, b

    w1, b1 = linear(ks[0], ks[1], input_size, hidden_size)
    w2, b2 = linear(ks[2], ks[3], hidden_size, hidden_size)
    w3, b3 = linear(ks[4], ks[5], hidden_size, num_classes)
    return w1, b1, w2, b2, w3, b3


if __name__ == "__main__":
    # Small shapes consistent with the module: bag-of-words style input.
    batch = 8
    input_size = 32
    hidden_size = 16
    num_classes = 8

    key = jax.random.PRNGKey(0)
    k_x, k_p = jax.random.split(key)

    x = jax.random.normal(k_x, (batch, input_size), jnp.float32)
    params = init_params(k_p, input_size, hidden_size, num_classes)
    prepared = prepare_params(*params)   # pad/cast weights once, not per call

    out = neural_net_forward(x, prepared)
    out = jax.block_until_ready(out)

    # Pure-JAX reference with the same bf16 operand quantization (f32 accum).
    w1, b1, w2, b2, w3, b3 = params
    bf = lambda a: a.astype(jnp.bfloat16).astype(jnp.float32)
    ref = jnp.maximum(bf(x) @ bf(w1) + b1, 0.0)
    ref = jnp.maximum(bf(ref) @ bf(w2) + b2, 0.0)
    ref = bf(ref) @ bf(w3) + b3

    assert out.shape == (batch, num_classes)
    assert jnp.allclose(out, ref, atol=2e-2, rtol=2e-2), float(
        jnp.max(jnp.abs(out - ref)))

    print("KERNEL_OK")
</pallas_src>

<mosaic_0001>
module attributes {stable_mosaic.version = 11 : i64} {
  func.func @mlp_kernel(%arg0: i32, %arg1: memref<16x128xbf16, #tpu.memory_space<vmem>>, %arg2: memref<128x128xbf16, #tpu.memory_space<vmem>>, %arg3: memref<128x128xbf16, #tpu.memory_space<vmem>>, %arg4: memref<128x128xbf16, #tpu.memory_space<vmem>>, %arg5: memref<8x128xf32, #tpu.memory_space<vmem>>, %arg6: memref<16x128xf32, #tpu.memory_space<vmem>>) attributes {dimension_semantics = [#tpu.dimension_semantics<parallel>], iteration_bounds = array<i64: 1>, scalar_prefetch = 0 : i64, scratch_operands = 0 : i64, tpu.core_type = #tpu.core_type<tc>, window_params = [{transform_indices = @transform_0, window_bounds = array<i64: 16, 128>}, {pipeline_mode = #tpu.pipeline_mode<synchronous>, transform_indices = @transform_1, window_bounds = array<i64: 128, 128>}, {pipeline_mode = #tpu.pipeline_mode<synchronous>, transform_indices = @transform_2, window_bounds = array<i64: 128, 128>}, {pipeline_mode = #tpu.pipeline_mode<synchronous>, transform_indices = @transform_3, window_bounds = array<i64: 128, 128>}, {pipeline_mode = #tpu.pipeline_mode<synchronous>, transform_indices = @transform_4, window_bounds = array<i64: 8, 128>}, {transform_indices = @transform_5, window_bounds = array<i64: 16, 128>}]} {
    %c0 = arith.constant 0 : index
    %c0_0 = arith.constant 0 : index
    %0 = vector.load %arg5[%c0, %c0_0] : memref<8x128xf32, #tpu.memory_space<vmem>>, vector<1x128xf32>
    %c1 = arith.constant 1 : index
    %c0_1 = arith.constant 0 : index
    %1 = vector.load %arg5[%c1, %c0_1] : memref<8x128xf32, #tpu.memory_space<vmem>>, vector<1x128xf32>
    %c2 = arith.constant 2 : index
    %c0_2 = arith.constant 0 : index
    %2 = vector.load %arg5[%c2, %c0_2] : memref<8x128xf32, #tpu.memory_space<vmem>>, vector<1x128xf32>
    %c0_3 = arith.constant 0 : index
    %c0_4 = arith.constant 0 : index
    %3 = vector.load %arg1[%c0_3, %c0_4] : memref<16x128xbf16, #tpu.memory_space<vmem>>, vector<16x128xbf16>
    %c0_5 = arith.constant 0 : index
    %c0_6 = arith.constant 0 : index
    %4 = vector.load %arg2[%c0_5, %c0_6] : memref<128x128xbf16, #tpu.memory_space<vmem>>, vector<128x128xbf16>
    %cst = arith.constant dense<0.000000e+00> : vector<16x128xf32>
    %5 = tpu.matmul %3, %4, %cst {dimension_numbers = #tpu.dot_dimension_numbers<[1], [0], [0], [1], [0, 0, 1, 1], [], []>} : vector<16x128xbf16>, vector<128x128xbf16>, vector<16x128xf32> -> vector<16x128xf32>
    %6 = vector.broadcast %0 : vector<1x128xf32> to vector<16x128xf32>
    %7 = arith.addf %5, %6 : vector<16x128xf32>
    %cst_7 = arith.constant 0.000000e+00 : f32
    %8 = vector.broadcast %cst_7 : f32 to vector<16x128xf32>
    %9 = arith.maximumf %7, %8 : vector<16x128xf32>
    %10 = arith.truncf %9 : vector<16x128xf32> to vector<16x128xbf16>
    %c0_8 = arith.constant 0 : index
    %c0_9 = arith.constant 0 : index
    %11 = vector.load %arg3[%c0_8, %c0_9] : memref<128x128xbf16, #tpu.memory_space<vmem>>, vector<128x128xbf16>
    %cst_10 = arith.constant dense<0.000000e+00> : vector<16x128xf32>
    %12 = tpu.matmul %10, %11, %cst_10 {dimension_numbers = #tpu.dot_dimension_numbers<[1], [0], [0], [1], [0, 0, 1, 1], [], []>} : vector<16x128xbf16>, vector<128x128xbf16>, vector<16x128xf32> -> vector<16x128xf32>
    %13 = vector.broadcast %1 : vector<1x128xf32> to vector<16x128xf32>
    %14 = arith.addf %12, %13 : vector<16x128xf32>
    %cst_11 = arith.constant 0.000000e+00 : f32
    %15 = vector.broadcast %cst_11 : f32 to vector<16x128xf32>
    %16 = arith.maximumf %14, %15 : vector<16x128xf32>
    %17 = arith.truncf %16 : vector<16x128xf32> to vector<16x128xbf16>
    %c0_12 = arith.constant 0 : index
    %c0_13 = arith.constant 0 : index
    %18 = vector.load %arg4[%c0_12, %c0_13] : memref<128x128xbf16, #tpu.memory_space<vmem>>, vector<128x128xbf16>
    %cst_14 = arith.constant dense<0.000000e+00> : vector<16x128xf32>
    %19 = tpu.matmul %17, %18, %cst_14 {dimension_numbers = #tpu.dot_dimension_numbers<[1], [0], [0], [1], [0, 0, 1, 1], [], []>} : vector<16x128xbf16>, vector<128x128xbf16>, vector<16x128xf32> -> vector<16x128xf32>
    %20 = vector.broadcast %2 : vector<1x128xf32> to vector<16x128xf32>
    %21 = arith.addf %19, %20 : vector<16x128xf32>
    %c0_15 = arith.constant 0 : index
    %c0_16 = arith.constant 0 : index
    %22 = vector.load %arg6[%c0_15, %c0_16] : memref<16x128xf32, #tpu.memory_space<vmem>>, vector<16x128xf32>
    tpu.vector_store %arg6[%c0_15, %c0_16], %21 {strides = array<i32>} : memref<16x128xf32, #tpu.memory_space<vmem>>, vector<16x128xf32>,
    return
  }
  func.func @transform_0(%arg0: i32) -> (i32, i32) {
    %c0_i32 = arith.constant 0 : i32
    %c0_i32_0 = arith.constant 0 : i32
    return %arg0, %c0_i32 : i32, i32
  }
  func.func @transform_1(%arg0: i32) -> (i32, i32) {
    %c0_i32 = arith.constant 0 : i32
    %c0_i32_0 = arith.constant 0 : i32
    %c0_i32_1 = arith.constant 0 : i32
    return %c0_i32, %c0_i32_0 : i32, i32
  }
  func.func @transform_2(%arg0: i32) -> (i32, i32) {
    %c0_i32 = arith.constant 0 : i32
    %c0_i32_0 = arith.constant 0 : i32
    %c0_i32_1 = arith.constant 0 : i32
    return %c0_i32, %c0_i32_0 : i32, i32
  }
  func.func @transform_3(%arg0: i32) -> (i32, i32) {
    %c0_i32 = arith.constant 0 : i32
    %c0_i32_0 = arith.constant 0 : i32
    %c0_i32_1 = arith.constant 0 : i32
    return %c0_i32, %c0_i32_0 : i32, i32
  }
  func.func @transform_4(%arg0: i32) -> (i32, i32) {
    %c0_i32 = arith.constant 0 : i32
    %c0_i32_0 = arith.constant 0 : i32
    %c0_i32_1 = arith.constant 0 : i32
    return %c0_i32, %c0_i32_0 : i32, i32
  }
  func.func @transform_5(%arg0: i32) -> (i32, i32) {
    %c0_i32 = arith.constant 0 : i32
    %c0_i32_0 = arith.constant 0 : i32
    return %arg0, %c0_i32 : i32, i32
  }
}

</mosaic_0001>

<llo_original>
// kernel: tpu_custom_call.1
$region0: #{tpu_custom_call.1}
  #allocation0 [shape = 'u32[]', space=smem, size = 0x4, offset = 0x4, fixed_abs, tag = 'smem constant byte address 0x4 - core index']
  #allocation1 [shape = 'u32[72,128]{1,0:T(1,128)}', space=vmem, size = 0x9000, scoped, tag = 'internal scratch']
  %s0 = inlined_call_operand.hbm [shape: bf16[16,128], index: 0, kind: input, shape index: {}]
  %s1 = inlined_call_operand.hbm [shape: bf16[128,128], index: 1, kind: input, shape index: {}]
  %s2 = inlined_call_operand.hbm [shape: bf16[128,128], index: 2, kind: input, shape index: {}]
  %s3 = inlined_call_operand.hbm [shape: bf16[128,128], index: 3, kind: input, shape index: {}]
  %s4 = inlined_call_operand.hbm [shape: f32[8,128], index: 4, kind: input, shape index: {}]
  %s5 = inlined_call_operand.hbm [shape: f32[16,128], index: 5, kind: output, shape index: {}]
  %s6 = sld [smem:[#allocation0]]
  $region50: #{tpu_custom_call.1} parent=0
    _
  %s8 = ssub.s32 1, %s6
  %s9 = scalar_select 0, %s8, %s6
  $region1: #{tpu_custom_call.1} parent=0
    #allocation2 [shape = 'u8[4096]{0}', space=vmem, size = 0x1000, scoped, tag = 'input window, operand 0, single buffered']
    #allocation3 [shape = 's32[1]{0}', space=sflag, size = 0x4, scoped, tag = 'scoped memory for tpu_custom_call.1']
    #allocation4 [shape = 's32[1]{0}', space=sflag, size = 0x4, scoped, tag = 'scoped memory for tpu_custom_call.1']
    #allocation5 [shape = 'u8[32768]{0}', space=vmem, size = 0x8000, scoped, tag = 'input window, operand 1, single buffered']
    #allocation6 [shape = 's32[1]{0}', space=sflag, size = 0x4, scoped, tag = 'scoped memory for tpu_custom_call.1']
    #allocation7 [shape = 'u8[32768]{0}', space=vmem, size = 0x8000, scoped, tag = 'input window, operand 2, single buffered']
    #allocation8 [shape = 'u8[32768]{0}', space=vmem, size = 0x8000, scoped, tag = 'input window, operand 3, single buffered']
    #allocation9 [shape = 's32[1]{0}', space=sflag, size = 0x4, scoped, tag = 'scoped memory for tpu_custom_call.1']
    #allocation10 [shape = 'u8[4096]{0}', space=vmem, size = 0x1000, scoped, tag = 'input window, operand 4, single buffered']
    #allocation11 [shape = 'u8[8192]{0}', space=vmem, size = 0x2000, scoped, tag = 'output window, operand 0, single buffered']
    %10 = vsyncpa [#allocation3], 0
    %11 = vsyncpa [#allocation6], 0
    %12 = vsyncpa [#allocation9], 0
    %13 = vsyncpa [#allocation4], 0
    // Predicated region
    $region2: #{tpu_custom_call.1} parent=1 // pred_check
      _
    $region3: #{tpu_custom_call.1} parent=1 // pred_check_branch
      %15 = sbr.rel (0) target = $region5
    $region4: #{tpu_custom_call.1} parent=1 // pred_region
      %17 = vsyncadd [#allocation3], 0
      %s18 = sshll.u32 %s0, 4
      %s19 = int_to_ptr.hbm [resolvable:$true] %s18
      %s20 = sshll.u32 [#allocation2], 4
      %s21 = int_to_ptr.vmem [resolvable:$true] %s20
      %26 = dma.hbm_to_vmem [thread:$0]  %s19, 128, %s21, [#allocation3], 64, 64, 4
    $region5: #{tpu_custom_call.1} parent=1 // pred_fallthru
      _
    // Predicated region
    $region6: #{tpu_custom_call.1} parent=1 // pred_check
      _
    $region7: #{tpu_custom_call.1} parent=1 // pred_check_branch
      %28 = sbr.rel (0) target = $region9
    $region8: #{tpu_custom_call.1} parent=1 // pred_region
      %30 = vsyncadd [#allocation6], 0
      %s31 = sshll.u32 %s1, 4
      %s32 = int_to_ptr.hbm [resolvable:$true] %s31
      %s33 = sshll.u32 [#allocation5], 4
      %s34 = int_to_ptr.vmem [resolvable:$true] %s33
      %39 = dma.hbm_to_vmem [thread:$0]  %s32, 1024, %s34, [#allocation6], 64, 64, 4
    $region9: #{tpu_custom_call.1} parent=1 // pred_fallthru
      _
    // Predicated region
    $region10: #{tpu_custom_call.1} parent=1 // pred_check
      _
    $region11: #{tpu_custom_call.1} parent=1 // pred_check_branch
      %41 = sbr.rel (0) target = $region13
    $region12: #{tpu_custom_call.1} parent=1 // pred_region
      %43 = vsyncadd [#allocation6], 0
      %s44 = sshll.u32 %s2, 4
      %s45 = int_to_ptr.hbm [resolvable:$true] %s44
      %s46 = sshll.u32 [#allocation7], 4
      %s47 = int_to_ptr.vmem [resolvable:$true] %s46
      %52 = dma.hbm_to_vmem [thread:$0]  %s45, 1024, %s47, [#allocation6], 64, 64, 4
    $region13: #{tpu_custom_call.1} parent=1 // pred_fallthru
      _
    // Predicated region
    $region14: #{tpu_custom_call.1} parent=1 // pred_check
      _
    $region15: #{tpu_custom_call.1} parent=1 // pred_check_branch
      %54 = sbr.rel (0) target = $region17
    $region16: #{tpu_custom_call.1} parent=1 // pred_region
      %56 = vsyncadd [#allocation9], 0
      %s57 = sshll.u32 %s3, 4
      %s58 = int_to_ptr.hbm [resolvable:$true] %s57
      %s59 = sshll.u32 [#allocation8], 4
      %s60 = int_to_ptr.vmem [resolvable:$true] %s59
      %65 = dma.hbm_to_vmem [thread:$0]  %s58, 1024, %s60, [#allocation9], 64, 64, 4
    $region17: #{tpu_custom_call.1} parent=1 // pred_fallthru
      _
    // Predicated region
    $region18: #{tpu_custom_call.1} parent=1 // pred_check
      _
    $region19: #{tpu_custom_call.1} parent=1 // pred_check_branch
      %67 = sbr.rel (0) target = $region21
    $region20: #{tpu_custom_call.1} parent=1 // pred_region
      %69 = vsyncadd [#allocation9], 0
      %s71 = sshll.u32 %s4, 4
      %s72 = int_to_ptr.hbm [resolvable:$true] %s71
      %s73 = sshll.u32 [#allocation10], 4
      %s74 = int_to_ptr.vmem [resolvable:$true] %s73
      %76 = dma.hbm_to_vmem [thread:$0]  %s72, 128, %s74, [#allocation9]
    $region21: #{tpu_custom_call.1} parent=1 // pred_fallthru
      _
    // Predicated region
    $region22: #{tpu_custom_call.1} parent=1 // pred_check
      _
    $region23: #{tpu_custom_call.1} parent=1 // pred_check_branch
      %78 = sbr.rel (0) target = $region25
    $region24: #{tpu_custom_call.1} parent=1 // pred_region
      %80 = dma.done [#allocation3], 128
    $region25: #{tpu_custom_call.1} parent=1 // pred_fallthru
      _
    // Predicated region
    $region26: #{tpu_custom_call.1} parent=1 // pred_check
      _
    $region27: #{tpu_custom_call.1} parent=1 // pred_check_branch
      %82 = sbr.rel (0) target = $region29
    $region28: #{tpu_custom_call.1} parent=1 // pred_region
      %84 = dma.done [#allocation6], 1024
    $region29: #{tpu_custom_call.1} parent=1 // pred_fallthru
      _
    // Predicated region
    $region30: #{tpu_custom_call.1} parent=1 // pred_check
      _
    $region31: #{tpu_custom_call.1} parent=1 // pred_check_branch
      %86 = sbr.rel (0) target = $region33
    $region32: #{tpu_custom_call.1} parent=1 // pred_region
      %88 = dma.done [#allocation6], 1024
    $region33: #{tpu_custom_call.1} parent=1 // pred_fallthru
      _
    // Predicated region
    $region34: #{tpu_custom_call.1} parent=1 // pred_check
      _
    $region35: #{tpu_custom_call.1} parent=1 // pred_check_branch
      %90 = sbr.rel (0) target = $region37
    $region36: #{tpu_custom_call.1} parent=1 // pred_region
      %92 = dma.done [#allocation9], 1024
    $region37: #{tpu_custom_call.1} parent=1 // pred_fallthru
      _
    // Predicated region
    $region38: #{tpu_custom_call.1} parent=1 // pred_check
      _
    $region39: #{tpu_custom_call.1} parent=1 // pred_check_branch
      %94 = sbr.rel (0) target = $region41
    $region40: #{tpu_custom_call.1} parent=1 // pred_region
      %96 = dma.done [#allocation9], 128
    $region41: #{tpu_custom_call.1} parent=1 // pred_fallthru
      _
    %v97 = vld [vmem:[#allocation10] sm:$0x1]
    %v98 = vld [vmem:[#allocation10 + $0x1] sm:$0x1]
    %v99 = vld [vmem:[#allocation10 + $0x2] sm:$0x1]
    %v100 = vld [vmem:[#allocation2] sm:$0xf]
    %v101 = vld [vmem:[#allocation2 + $0x4] sm:$0xf]
    %v102 = vld [vmem:[#allocation5] sm:$0xf]
    %v103 = vld [vmem:[#allocation5 + $0x4] sm:$0xf]
    %v104 = vld [vmem:[#allocation5 + $0x8] sm:$0xf]
    %v105 = vld [vmem:[#allocation5 + $0xc] sm:$0xf]
    %v106 = vld [vmem:[#allocation5 + $0x10] sm:$0xf]
    %v107 = vld [vmem:[#allocation5 + $0x14] sm:$0xf]
    %v108 = vld [vmem:[#allocation5 + $0x18] sm:$0xf]
    %v109 = vld [vmem:[#allocation5 + $0x1c] sm:$0xf]
    %v110 = vld [vmem:[#allocation5 + $0x20] sm:$0xf]
    %v111 = vld [vmem:[#allocation5 + $0x24] sm:$0xf]
    %v112 = vld [vmem:[#allocation5 + $0x28] sm:$0xf]
    %v113 = vld [vmem:[#allocation5 + $0x2c] sm:$0xf]
    %v114 = vld [vmem:[#allocation5 + $0x30] sm:$0xf]
    %v115 = vld [vmem:[#allocation5 + $0x34] sm:$0xf]
    %v116 = vld [vmem:[#allocation5 + $0x38] sm:$0xf]
    %v117 = vld [vmem:[#allocation5 + $0x3c] sm:$0xf]
    %v118 = vperm.slane %v97, 0
    %v121 = vunpack.c.l.b16 %v100
    %v122 = vunpack.c.l.b16 %v101
    %v123 = vpack.c.b16 %v122, %v121
    %v141 = vunpack.c.l.b16 %v102
    %v142 = vunpack.c.l.b16 %v103
    %v143 = vunpack.c.l.b16 %v104
    %v144 = vunpack.c.l.b16 %v105
    %v145 = vunpack.c.l.b16 %v106
    %v146 = vunpack.c.l.b16 %v107
    %v147 = vunpack.c.l.b16 %v108
    %v148 = vunpack.c.l.b16 %v109
    %v149 = vunpack.c.l.b16 %v110
    %v150 = vunpack.c.l.b16 %v111
    %v151 = vunpack.c.l.b16 %v112
    %v152 = vunpack.c.l.b16 %v113
    %v153 = vunpack.c.l.b16 %v114
    %v154 = vunpack.c.l.b16 %v115
    %v155 = vunpack.c.l.b16 %v116
    %v156 = vunpack.c.l.b16 %v117
    %v157 = vpack.c.b16 %v142, %v141
    %v158 = vpack.c.b16 %v144, %v143
    %v159 = vpack.c.b16 %v146, %v145
    %v160 = vpack.c.b16 %v148, %v147
    %v161 = vpack.c.b16 %v150, %v149
    %v162 = vpack.c.b16 %v152, %v151
    %v163 = vpack.c.b16 %v154, %v153
    %v164 = vpack.c.b16 %v156, %v155
    %173 = vmatpush.bf16.msra.mxu0 %v164
    %174 = vmatpush.bf16.msra.mxu0 %v163
    %175 = vmatpush.bf16.msra.mxu0 %v162
    %176 = vmatpush.bf16.msra.mxu0 %v161
    %177 = vmatpush.bf16.msra.mxu0 %v160
    %178 = vmatpush.bf16.msra.mxu0 %v159
    %179 = vmatpush.bf16.msra.mxu0 %v158
    %180 = vmatpush.bf16.msra.mxu0 %v157
    %181 = vmatmul.bf16.gmra.mxu0 %v123
    %v182 = vpop.f32.mrf.mxu0
    %v183 = vadd.f32 %v118, %v182
    %v184 = vpop.f32.mrf.mxu0
    %v185 = vadd.f32 %v118, %v184
    %186 = vdwg.mxu0
    %v187 = vmax.f32 %v183, 0.0
    %v188 = vmax.f32 %v185, 0.0
    %v189 = vpack.c.bf16 %v188, %v187
    %v190 = vld [vmem:[#allocation7] sm:$0xf]
    %v191 = vld [vmem:[#allocation7 + $0x4] sm:$0xf]
    %v192 = vld [vmem:[#allocation7 + $0x8] sm:$0xf]
    %v193 = vld [vmem:[#allocation7 + $0xc] sm:$0xf]
    %v194 = vld [vmem:[#allocation7 + $0x10] sm:$0xf]
    %v195 = vld [vmem:[#allocation7 + $0x14] sm:$0xf]
    %v196 = vld [vmem:[#allocation7 + $0x18] sm:$0xf]
    %v197 = vld [vmem:[#allocation7 + $0x1c] sm:$0xf]
    %v198 = vld [vmem:[#allocation7 + $0x20] sm:$0xf]
    %v199 = vld [vmem:[#allocation7 + $0x24] sm:$0xf]
    %v200 = vld [vmem:[#allocation7 + $0x28] sm:$0xf]
    %v201 = vld [vmem:[#allocation7 + $0x2c] sm:$0xf]
    %v202 = vld [vmem:[#allocation7 + $0x30] sm:$0xf]
    %v203 = vld [vmem:[#allocation7 + $0x34] sm:$0xf]
    %v204 = vld [vmem:[#allocation7 + $0x38] sm:$0xf]
    %v205 = vld [vmem:[#allocation7 + $0x3c] sm:$0xf]
    %v206 = vperm.slane %v98, 0
    %v223 = vunpack.c.l.b16 %v190
    %v224 = vunpack.c.l.b16 %v191
    %v225 = vunpack.c.l.b16 %v192
    %v226 = vunpack.c.l.b16 %v193
    %v227 = vunpack.c.l.b16 %v194
    %v228 = vunpack.c.l.b16 %v195
    %v229 = vunpack.c.l.b16 %v196
    %v230 = vunpack.c.l.b16 %v197
    %v231 = vunpack.c.l.b16 %v198
    %v232 = vunpack.c.l.b16 %v199
    %v233 = vunpack.c.l.b16 %v200
    %v234 = vunpack.c.l.b16 %v201
    %v235 = vunpack.c.l.b16 %v202
    %v236 = vunpack.c.l.b16 %v203
    %v237 = vunpack.c.l.b16 %v204
    %v238 = vunpack.c.l.b16 %v205
    %v239 = vpack.c.b16 %v224, %v223
    %v240 = vpack.c.b16 %v226, %v225
    %v241 = vpack.c.b16 %v228, %v227
    %v242 = vpack.c.b16 %v230, %v229
    %v243 = vpack.c.b16 %v232, %v231
    %v244 = vpack.c.b16 %v234, %v233
    %v245 = vpack.c.b16 %v236, %v235
    %v246 = vpack.c.b16 %v238, %v237
    %255 = vmatpush.bf16.msra.mxu0 %v246
    %256 = vmatpush.bf16.msra.mxu0 %v245
    %257 = vmatpush.bf16.msra.mxu0 %v244
    %258 = vmatpush.bf16.msra.mxu0 %v243
    %259 = vmatpush.bf16.msra.mxu0 %v242
    %260 = vmatpush.bf16.msra.mxu0 %v241
    %261 = vmatpush.bf16.msra.mxu0 %v240
    %262 = vmatpush.bf16.msra.mxu0 %v239
    %263 = vmatmul.bf16.gmra.mxu0 %v189
    %v264 = vpop.f32.mrf.mxu0
    %v265 = vadd.f32 %v206, %v264
    %v266 = vpop.f32.mrf.mxu0
    %v267 = vadd.f32 %v206, %v266
    %268 = vdwg.mxu0
    %v269 = vmax.f32 %v265, 0.0
    %v270 = vmax.f32 %v267, 0.0
    %v271 = vpack.c.bf16 %v270, %v269
    %v272 = vld [vmem:[#allocation8] sm:$0xf]
    %v273 = vld [vmem:[#allocation8 + $0x4] sm:$0xf]
    %v274 = vld [vmem:[#allocation8 + $0x8] sm:$0xf]
    %v275 = vld [vmem:[#allocation8 + $0xc] sm:$0xf]
    %v276 = vld [vmem:[#allocation8 + $0x10] sm:$0xf]
    %v277 = vld [vmem:[#allocation8 + $0x14] sm:$0xf]
    %v278 = vld [vmem:[#allocation8 + $0x18] sm:$0xf]
    %v279 = vld [vmem:[#allocation8 + $0x1c] sm:$0xf]
    %v280 = vld [vmem:[#allocation8 + $0x20] sm:$0xf]
    %v281 = vld [vmem:[#allocation8 + $0x24] sm:$0xf]
    %v282 = vld [vmem:[#allocation8 + $0x28] sm:$0xf]
    %v283 = vld [vmem:[#allocation8 + $0x2c] sm:$0xf]
    %v284 = vld [vmem:[#allocation8 + $0x30] sm:$0xf]
    %v285 = vld [vmem:[#allocation8 + $0x34] sm:$0xf]
    %v286 = vld [vmem:[#allocation8 + $0x38] sm:$0xf]
    %v287 = vld [vmem:[#allocation8 + $0x3c] sm:$0xf]
    %v288 = vperm.slane %v99, 0
    %v305 = vunpack.c.l.b16 %v272
    %v306 = vunpack.c.l.b16 %v273
    %v307 = vunpack.c.l.b16 %v274
    %v308 = vunpack.c.l.b16 %v275
    %v309 = vunpack.c.l.b16 %v276
    %v310 = vunpack.c.l.b16 %v277
    %v311 = vunpack.c.l.b16 %v278
    %v312 = vunpack.c.l.b16 %v279
    %v313 = vunpack.c.l.b16 %v280
    %v314 = vunpack.c.l.b16 %v281
    %v315 = vunpack.c.l.b16 %v282
    %v316 = vunpack.c.l.b16 %v283
    %v317 = vunpack.c.l.b16 %v284
    %v318 = vunpack.c.l.b16 %v285
    %v319 = vunpack.c.l.b16 %v286
    %v320 = vunpack.c.l.b16 %v287
    %v321 = vpack.c.b16 %v306, %v305
    %v322 = vpack.c.b16 %v308, %v307
    %v323 = vpack.c.b16 %v310, %v309
    %v324 = vpack.c.b16 %v312, %v311
    %v325 = vpack.c.b16 %v314, %v313
    %v326 = vpack.c.b16 %v316, %v315
    %v327 = vpack.c.b16 %v318, %v317
    %v328 = vpack.c.b16 %v320, %v319
    %337 = vmatpush.bf16.msra.mxu0 %v328
    %338 = vmatpush.bf16.msra.mxu0 %v327
    %339 = vmatpush.bf16.msra.mxu0 %v326
    %340 = vmatpush.bf16.msra.mxu0 %v325
    %341 = vmatpush.bf16.msra.mxu0 %v324
    %342 = vmatpush.bf16.msra.mxu0 %v323
    %343 = vmatpush.bf16.msra.mxu0 %v322
    %344 = vmatpush.bf16.msra.mxu0 %v321
    %345 = vmatmul.bf16.gmra.mxu0 %v271
    %v346 = vpop.f32.mrf.mxu0
    %v347 = vadd.f32 %v288, %v346
    %v348 = vpop.f32.mrf.mxu0
    %v349 = vadd.f32 %v288, %v348
    %350 = vdwg.mxu0
    %351 = vst [vmem:[#allocation11] sm:$0xff] %v347
    %352 = vst [vmem:[#allocation11 + $0x8] sm:$0xff] %v349
    // Predicated region
    $region42: #{tpu_custom_call.1} parent=1 // pred_check
      _
    $region43: #{tpu_custom_call.1} parent=1 // pred_check_branch
      %354 = sbr.rel (0) target = $region45
    $region44: #{tpu_custom_call.1} parent=1 // pred_region
      %356 = vsyncadd [#allocation4], 0
      %s357 = sshll.u32 [#allocation11], 4
      %s358 = int_to_ptr.vmem [resolvable:$true] %s357
      %s359 = sshll.u32 %s5, 4
      %s360 = int_to_ptr.hbm [resolvable:$true] %s359
      %365 = dma.vmem_to_hbm [thread:$0]  %s358, 256, %s360, [#allocation4], 128, 128, 8
    $region45: #{tpu_custom_call.1} parent=1 // pred_fallthru
      _
    // Predicated region
    $region46: #{tpu_custom_call.1} parent=1 // pred_check
      _
    $region47: #{tpu_custom_call.1} parent=1 // pred_check_branch
      %367 = sbr.rel (0) target = $region49
    $region48: #{tpu_custom_call.1} parent=1 // pred_region
      %369 = dma.done [#allocation4], 256
    $region49: #{tpu_custom_call.1} parent=1 // pred_fallthru
      _
    %370 = vsyncpa [#allocation3], 1
    %371 = vsyncpa [#allocation6], 1
    %372 = vsyncpa [#allocation9], 1
    %373 = vsyncpa [#allocation4], 1

</llo_original>
